<compile_context>
chip_gen: v6e
topology: v6e:2x2x1
jax: 0.10.0
libtpu: 0.0.40
codegen_flags: <defaults>
</compile_context>

<pallas_src>
import jax
import jax.numpy as jnp
from jax.experimental import pallas as pl
from jax.experimental.pallas import tpu as pltpu


def _eca_kernel(w_ref, x_ref, o_ref):
    """One grid step. x_ref/o_ref: (Bt, C, HW) VMEM blocks; w_ref: (3,) f32 SMEM."""
    x = x_ref[...]                                     # (Bt, C, HW), HW lane-minor
    bt, c, hw = x.shape

    # Global average pool over the spatial (lane) axis, f32 accumulation.
    m = jnp.sum(x, axis=-1, keepdims=True, dtype=jnp.float32) * (1.0 / hw)  # (Bt, C, 1)

    # k=3, pad=1, no-bias channel conv (cross-correlation, = PyTorch Conv1d):
    #   y[c] = w0*m[c-1] + w1*m[c] + w2*m[c+1]   (zero padded at both ends)
    # Neighbours come from 1-sublane shifts of the tiny (Bt, C, 1) f32 column
    # (a few KB -- negligible next to the (Bt, C, HW) bulk traffic).
    # TODO(synk): switch these shifts to pltpu.roll(+iota edge mask) once the
    # sublane rotate handles arbitrary (non-8-aligned) channel counts.
    if c > 1:
        zero = jnp.zeros((bt, 1, 1), jnp.float32)
        m_prev = jnp.concatenate([zero, m[:, : c - 1, :]], axis=1)   # m[c-1]
        m_next = jnp.concatenate([m[:, 1:, :], zero], axis=1)        # m[c+1]
    else:
        m_prev = jnp.zeros_like(m)
        m_next = jnp.zeros_like(m)
    y = w_ref[0] * m_prev + w_ref[1] * m + w_ref[2] * m_next         # (Bt, C, 1) f32

    # Sigmoid gate (EUP), cast once to the activation dtype, then a single bulk
    # VPU multiply with lane-broadcast over HW.  (For bf16 activations this
    # quantizes the gate to bf16 before the multiply; covered by tolerance and
    # keeps per-element work minimal, which matters on v5e.)
    s = jax.nn.sigmoid(y).astype(x.dtype)                            # (Bt, C, 1)
    o_ref[...] = x * s


def _vmem_budget_bytes():
    """~85% of this generation's physical VMEM (64 MiB v7x, 128 MiB v5e/v6e)."""
    try:
        cap = int(pltpu.get_tpu_info().vmem_capacity_bytes)
    except Exception:                       # interpret mode / unknown target
        cap = 64 * 1024 * 1024
    return int(cap * 0.85)


def eca_layer(x, weight, *, donate_input=False, block_bytes_target=4 * 1024 * 1024):
    """ECA forward, NCHW in / NCHW out (PyTorch-compatible), no wrapper transposes.

    x:      (B, C, H, W), float32 or bfloat16.
    weight: Conv1d kernel with 3 taps (shape (3,), (1, 3) or (1, 1, 3)), no bias.
    """
    B, C, H, W = x.shape
    HW = H * W
    w = jnp.asarray(weight, jnp.float32).reshape(-1)
    assert w.shape == (3,), "ECA expects k_size=3"

    x3 = x.reshape(B, C, HW)                # free reshape, no data movement

    itemsize = jnp.dtype(x3.dtype).itemsize
    per_image = C * HW * itemsize
    budget = _vmem_budget_bytes()

    # Batch images per grid step: target ~1-4 MiB blocks so DMA time beats the
    # ~0.35 us fixed per-step cost, while the double-buffered in+out footprint
    # (4x block) stays well inside the generation's VMEM budget.
    target = max(per_image, min(block_bytes_target, budget // 8))
    bt = 1
    for d in range(1, B + 1):
        if B % d == 0 and d * per_image <= target:
            bt = d
    block_bytes = bt * per_image

    # TODO(synk): when even a single-image block blows the budget (4*block >
    # budget; huge early-layer maps on v7x's 64 MiB VMEM), add a manual-DMA
    # streaming variant (memory_space=pl.ANY, HW-chunked double buffering that
    # parks x once in a 1x-block scratch) to keep single-pass HBM traffic.
    # TODO(synk): add a channel-tile "parallel" grid axis (k=3 halo only on the
    # tiny mean column) so small-B workloads feed both v7x TensorCores.

    vmem_limit = int(min(budget, max(4 * block_bytes + (1 << 20), 32 * 1024 * 1024)))

    grid_spec = pltpu.PrefetchScalarGridSpec(
        num_scalar_prefetch=1,
        grid=(B // bt,),
        in_specs=[pl.BlockSpec((bt, C, HW), lambda b, w_ref: (b, 0, 0))],
        out_specs=pl.BlockSpec((bt, C, HW), lambda b, w_ref: (b, 0, 0)),
    )

    out3 = pl.pallas_call(
        _eca_kernel,
        out_shape=jax.ShapeDtypeStruct((B, C, HW), x3.dtype),
        grid_spec=grid_spec,
        compiler_params=pltpu.CompilerParams(
            dimension_semantics=("parallel",),
            vmem_limit_bytes=vmem_limit,
        ),
        input_output_aliases=({1: 0} if donate_input else {}),
    )(w, x3)
    return out3.reshape(B, C, H, W)


def eca_reference(x, weight):
    """Pure-JAX reference mirroring the PyTorch module (f32 math)."""
    B, C, H, W = x.shape
    w = jnp.asarray(weight, jnp.float32).reshape(-1)
    m = jnp.mean(x.astype(jnp.float32), axis=(2, 3))            # (B, C)
    m_pad = jnp.pad(m, ((0, 0), (1, 1)))                        # (B, C+2)
    y = (w[0] * m_pad[:, 0:C]
         + w[1] * m_pad[:, 1:C + 1]
         + w[2] * m_pad[:, 2:C + 2])                            # (B, C)
    s = jax.nn.sigmoid(y)[:, :, None, None]                     # (B, C, 1, 1)
    return x.astype(jnp.float32) * s


if __name__ == "__main__":
    key = jax.random.PRNGKey(0)
    kx, kw, kx2 = jax.random.split(key, 3)

    B, C, H, W = 2, 4, 16, 16
    x = jax.random.normal(kx, (B, C, H, W), dtype=jnp.float32)
    # Deterministic conv1d weight (torch shape (out=1, in=1, k=3) -> (3,) here).
    weight = jax.random.normal(kw, (3,), dtype=jnp.float32) * 0.5

    # float32 path, multi-image block (Bt = B)
    out = eca_layer(x, weight)
    jax.block_until_ready(out)
    ref = eca_reference(x, weight)
    assert out.shape == x.shape and out.dtype == x.dtype
    assert jnp.allclose(out, ref, atol=1e-5, rtol=1e-5), "f32 mismatch vs reference"

    # float32 path, forced single-image blocks (grid > 1) to exercise batching logic
    out_g = eca_layer(x, weight, block_bytes_target=1)
    jax.block_until_ready(out_g)
    assert jnp.allclose(out_g, ref, atol=1e-5, rtol=1e-5), "grid>1 mismatch vs reference"

    # non-128-aligned spatial size (7x7 late-layer style map)
    x2 = jax.random.normal(kx2, (4, 8, 7, 7), dtype=jnp.float32)
    out2 = eca_layer(x2, weight)
    jax.block_until_ready(out2)
    ref2 = eca_reference(x2, weight)
    assert jnp.allclose(out2, ref2, atol=1e-5, rtol=1e-5), "7x7 mismatch vs reference"

    # bfloat16 path (bf16 activations end-to-end, f32 accumulation inside kernel)
    x_bf16 = x.astype(jnp.bfloat16)
    out_bf16 = eca_layer(x_bf16, weight)
    jax.block_until_ready(out_bf16)
    ref_bf16 = eca_reference(x_bf16, weight)
    assert out_bf16.shape == x.shape and out_bf16.dtype == jnp.bfloat16
    assert jnp.allclose(out_bf16.astype(jnp.float32), ref_bf16,
                        atol=3e-2, rtol=3e-2), "bf16 mismatch vs reference"

    print("KERNEL_OK")
</pallas_src>

<mosaic_0001>
module attributes {stable_mosaic.version = 11 : i64} {
  func.func @_eca_kernel(%arg0: i32, %arg1: memref<3xf32, #tpu.memory_space<smem>>, %arg2: memref<2x4x256xf32, #tpu.memory_space<vmem>>, %arg3: memref<2x4x256xf32, #tpu.memory_space<vmem>>) attributes {dimension_semantics = [#tpu.dimension_semantics<parallel>], iteration_bounds = array<i64: 1>, scalar_prefetch = 1 : i64, scratch_operands = 0 : i64, tpu.core_type = #tpu.core_type<tc>, window_params = [{transform_indices = @transform_0, window_bounds = array<i64: 2, 4, 256>}, {transform_indices = @transform_1, window_bounds = array<i64: 2, 4, 256>}]} {
    %c0 = arith.constant 0 : index
    %c0_0 = arith.constant 0 : index
    %c0_1 = arith.constant 0 : index
    %0 = vector.load %arg2[%c0, %c0_0, %c0_1] : memref<2x4x256xf32, #tpu.memory_space<vmem>>, vector<2x4x256xf32>
    %cst = arith.constant dense<0.000000e+00> : vector<2x4xf32>
    %1 = vector.multi_reduction <add>, %0, %cst [2] : vector<2x4x256xf32> to vector<2x4xf32>
    %2 = vector.shape_cast %1 : vector<2x4xf32> to vector<2x4x1xf32>
    %cst_2 = arith.constant 3.906250e-03 : f32
    %3 = vector.broadcast %cst_2 : f32 to vector<2x4x1xf32>
    %4 = arith.mulf %2, %3 : vector<2x4x1xf32>
    %cst_3 = arith.constant 0.000000e+00 : f32
    %5 = vector.broadcast %cst_3 : f32 to vector<2x1x1xf32>
    %6 = vector.extract_strided_slice %4 {offsets = [0, 0, 0], sizes = [2, 3, 1], strides = [1, 1, 1]} : vector<2x4x1xf32> to vector<2x3x1xf32>
    %7 = tpu.concatenate %5, %6 in 1 : vector<2x1x1xf32>, vector<2x3x1xf32> -> vector<2x4x1xf32>
    %8 = vector.extract_strided_slice %4 {offsets = [0, 1, 0], sizes = [2, 3, 1], strides = [1, 1, 1]} : vector<2x4x1xf32> to vector<2x3x1xf32>
    %9 = tpu.concatenate %8, %5 in 1 : vector<2x3x1xf32>, vector<2x1x1xf32> -> vector<2x4x1xf32>
    %c0_4 = arith.constant 0 : index
    %10 = memref.load %arg1[%c0_4] : memref<3xf32, #tpu.memory_space<smem>>
    %11 = vector.broadcast %10 : f32 to vector<2x4x1xf32>
    %12 = arith.mulf %11, %7 : vector<2x4x1xf32>
    %c1 = arith.constant 1 : index
    %13 = memref.load %arg1[%c1] : memref<3xf32, #tpu.memory_space<smem>>
    %14 = vector.broadcast %13 : f32 to vector<2x4x1xf32>
    %15 = arith.mulf %14, %4 : vector<2x4x1xf32>
    %16 = arith.addf %12, %15 : vector<2x4x1xf32>
    %c2 = arith.constant 2 : index
    %17 = memref.load %arg1[%c2] : memref<3xf32, #tpu.memory_space<smem>>
    %18 = vector.broadcast %17 : f32 to vector<2x4x1xf32>
    %19 = arith.mulf %18, %9 : vector<2x4x1xf32>
    %20 = arith.addf %16, %19 : vector<2x4x1xf32>
    %21 = arith.negf %20 : vector<2x4x1xf32>
    %22 = math.exp %21 : vector<2x4x1xf32>
    %cst_5 = arith.constant 1.000000e+00 : f32
    %23 = vector.broadcast %cst_5 : f32 to vector<2x4x1xf32>
    %24 = arith.addf %23, %22 : vector<2x4x1xf32>
    %25 = arith.divf %23, %24 : vector<2x4x1xf32>
    %26 = vector.broadcast %25 : vector<2x4x1xf32> to vector<2x4x256xf32>
    %27 = arith.mulf %0, %26 : vector<2x4x256xf32>
    %c0_6 = arith.constant 0 : index
    %c0_7 = arith.constant 0 : index
    %c0_8 = arith.constant 0 : index
    %28 = vector.load %arg3[%c0_6, %c0_7, %c0_8] : memref<2x4x256xf32, #tpu.memory_space<vmem>>, vector<2x4x256xf32>
    tpu.vector_store %arg3[%c0_6, %c0_7, %c0_8], %27 {strides = array<i32>} : memref<2x4x256xf32, #tpu.memory_space<vmem>>, vector<2x4x256xf32>,
    return
  }
  func.func @transform_0(%arg0: i32, %arg1: memref<3xf32, #tpu.memory_space<smem>>) -> (i32, i32, i32) {
    %c0_i32 = arith.constant 0 : i32
    %c0_i32_0 = arith.constant 0 : i32
    %c0_i32_1 = arith.constant 0 : i32
    return %arg0, %c0_i32, %c0_i32_0 : i32, i32, i32
  }
  func.func @transform_1(%arg0: i32, %arg1: memref<3xf32, #tpu.memory_space<smem>>) -> (i32, i32, i32) {
    %c0_i32 = arith.constant 0 : i32
    %c0_i32_0 = arith.constant 0 : i32
    %c0_i32_1 = arith.constant 0 : i32
    return %arg0, %c0_i32, %c0_i32_0 : i32, i32, i32
  }
}

</mosaic_0001>

<llo_original>
// kernel: tpu_custom_call.1
$region0: #{tpu_custom_call.1}
  #allocation0 [shape = 'u32[]', space=smem, size = 0x4, offset = 0x4, fixed_abs, tag = 'smem constant byte address 0x4 - core index']
  #allocation1 [shape = 'u32[144,128]{1,0:T(1,128)}', space=vmem, size = 0x12000, scoped, tag = 'internal scratch']
  #allocation2 [shape = 's32[1]{0}', space=sflag, size = 0x4, scoped, tag = 'scoped memory for tpu_custom_call.1']
  #allocation3 [shape = 'u8[512]{0}', space=smem, size = 0x200, scoped, tag = 'prefetched SMEM operand 0']
  %s0 = inlined_call_operand.hbm [shape: f32[3], index: 0, kind: input, shape index: {}]
  %s1 = inlined_call_operand.hbm [shape: f32[2,4,256], index: 1, kind: input, shape index: {}]
  %s2 = inlined_call_operand.hbm [shape: f32[2,4,256], index: 2, kind: output, shape index: {}]
  %s3 = sld [smem:[#allocation0]]
  $region18: #{tpu_custom_call.1} parent=0
    _
  %s5 = ssub.s32 1, %s3
  %s6 = scalar_select 0, %s5, %s3
  %8 = dma.hbm_to_smem %s0, 16, [#allocation3], [#allocation2]
  %9 = dma.done [#allocation2], 16
  %10 = sfence
  $region1: #{tpu_custom_call.1} parent=0
    #allocation4 [shape = 'u8[8192]{0}', space=vmem, size = 0x2000, scoped, tag = 'input window, operand 1, single buffered']
    #allocation5 [shape = 's32[1]{0}', space=sflag, size = 0x4, scoped, tag = 'scoped memory for tpu_custom_call.1']
    #allocation6 [shape = 's32[1]{0}', space=sflag, size = 0x4, scoped, tag = 'scoped memory for tpu_custom_call.1']
    #allocation7 [shape = 'u8[8192]{0}', space=vmem, size = 0x2000, scoped, tag = 'output window, operand 0, single buffered']
    %11 = vsyncpa [#allocation5], 0
    %12 = vsyncpa [#allocation6], 0
    // Predicated region
    $region2: #{tpu_custom_call.1} parent=1 // pred_check
      _
    $region3: #{tpu_custom_call.1} parent=1 // pred_check_branch
      %14 = sbr.rel (0) target = $region5
    $region4: #{tpu_custom_call.1} parent=1 // pred_region
      %s16 = ssub.s32 256, 256
      %17 = vsyncadd [#allocation5], %s16
      %s18 = sshll.u32 [#allocation4], 4
      %s19 = int_to_ptr.vmem [resolvable:$true] %s18
      %24 = dma.hbm_to_vmem [thread:$0]  %s1, 256, %s19, [#allocation5], 128, 128, 8
    $region5: #{tpu_custom_call.1} parent=1 // pred_fallthru
      _
    // Predicated region
    $region6: #{tpu_custom_call.1} parent=1 // pred_check
      _
    $region7: #{tpu_custom_call.1} parent=1 // pred_check_branch
      %26 = sbr.rel (0) target = $region9
    $region8: #{tpu_custom_call.1} parent=1 // pred_region
      %27 = dma.done [#allocation5], 256
    $region9: #{tpu_custom_call.1} parent=1 // pred_fallthru
      _
    %v28 = vld [vmem:[#allocation4] sm:$0xff]
    %v29 = vld [vmem:[#allocation4 + $0x8] sm:$0xff]
    %v32 = vcombine.high %v28, %v28
    %v33 = vcombine.high %v29, %v29
    %vm36 = vcmask 1043456
    %v37 = vsel %vm36, %v28, 0.0
    %v38 = vsel %vm36, %v32, 0.0
    %v39 = vadd.f32 %v37, %v38
    %40 = vadd.xlane.f32.xlu0 %v39
    %v41 = vpop.xlane.xlu0 %40
    %v42 = vsel %vm36, %v29, 0.0
    %v43 = vsel %vm36, %v33, 0.0
    %v44 = vadd.f32 %v42, %v43
    %45 = vadd.xlane.f32.xlu0 %v44
    %v46 = vpop.xlane.xlu0 %45
    %v47 = vmul.f32 %v41, 0.00390625
    %v48 = vmul.f32 %v46, 0.00390625
    %v51 = vrot.slane %v47, 7
    %v52 = vrot.slane %v48, 7
    %vm55 = vcmask 1040384
    %v56 = vsel %vm55, 0.0, %v51
    %v57 = vsel %vm55, 0.0, %v52
    %v58 = vrot.slane %v47, 1
    %v59 = vrot.slane %v48, 1
    %vm62 = vcmask 1042432
    %v63 = vsel %vm62, %v58, 0.0
    %v64 = vsel %vm62, %v59, 0.0
    %s65 = sld [smem:[#allocation3]]
    %v66 = vstv %s65
    %v67 = vmul.f32 %v66, %v56
    %v68 = vmul.f32 %v66, %v57
    %s69 = sld [smem:[#allocation3 + $0x1]]
    %v70 = vstv %s69
    %v71 = vmul.f32 %v70, %v47
    %v72 = vmul.f32 %v70, %v48
    %v73 = vadd.f32 %v67, %v71
    %v74 = vadd.f32 %v68, %v72
    %s75 = sld [smem:[#allocation3 + $0x2]]
    %v76 = vstv %s75
    %v77 = vmul.f32 %v76, %v63
    %v78 = vmul.f32 %v76, %v64
    %v79 = vadd.f32 %v73, %v77
    %v80 = vadd.f32 %v74, %v78
    %v81 = vxor.u32 %v79, 2147483648
    %v82 = vxor.u32 %v80, 2147483648
    %v83 = vmul.f32 %v81, 1.442695
    %v84 = vpow.pop %v83
    %v85 = vmul.f32 %v82, 1.442695
    %v86 = vpow.pop %v85
    %v87 = vadd.f32 %v84, 1.0
    %v88 = vadd.f32 %v86, 1.0
    %v89 = vrcp.pop %v87
    %v90 = vmul.f32 1.0, %v89
    %v91 = vrcp.pop %v88
    %v92 = vmul.f32 1.0, %v91
    %94 = vset.pattern.permute.xlu0 0
    %95 = vperm.xlu0 %94, %v90
    %v96 = vpop.permute.xlu0 %95
    %98 = vset.pattern.permute.xlu0 0
    %99 = vperm.xlu0 %98, %v92
    %v100 = vpop.permute.xlu0 %99
    %v102 = vunpack.c.l.s4 839922192
    %v103 = vunpack.c.0.s8 %v102
    %v104 = vlaneseq
    %v105 = vshrl.u32 %v104, 7
    %v106 = vsub.s32 %v103, %v105
    %v107 = vrot.slane %v96, %v106
    %v109 = vunpack.c.l.s4 839922192
    %v110 = vunpack.c.0.s8 %v109
    %v111 = vlaneseq
    %v112 = vshrl.u32 %v111, 7
    %v113 = vsub.s32 %v110, %v112
    %v114 = vrot.slane %v100, %v113
    %v117 = vmul.f32 %v28, %v107
    %v118 = vmul.f32 %v29, %v114
    %119 = vst [vmem:[#allocation7] sm:$0xff] %v117
    %120 = vst [vmem:[#allocation7 + $0x8] sm:$0xff] %v118
    // Predicated region
    $region10: #{tpu_custom_call.1} parent=1 // pred_check
      _
    $region11: #{tpu_custom_call.1} parent=1 // pred_check_branch
      %122 = sbr.rel (0) target = $region13
    $region12: #{tpu_custom_call.1} parent=1 // pred_region
      %s124 = ssub.s32 256, 256
      %125 = vsyncadd [#allocation6], %s124
      %s126 = sshll.u32 [#allocation7], 4
      %s127 = int_to_ptr.vmem [resolvable:$true] %s126
      %132 = dma.vmem_to_hbm [thread:$0]  %s127, 256, %s2, [#allocation6], 128, 128, 8
    $region13: #{tpu_custom_call.1} parent=1 // pred_fallthru
      _
    // Predicated region
    $region14: #{tpu_custom_call.1} parent=1 // pred_check
      _
    $region15: #{tpu_custom_call.1} parent=1 // pred_check_branch
      %134 = sbr.rel (0) target = $region17
    $region16: #{tpu_custom_call.1} parent=1 // pred_region
      %135 = dma.done [#allocation6], 256
    $region17: #{tpu_custom_call.1} parent=1 // pred_fallthru
      _
    %136 = vsyncpa [#allocation5], 1
    %137 = vsyncpa [#allocation6], 1

</llo_original>
